<compile_context>
chip_gen: v5e
topology: v5e:2x2
jax: 0.10.0
libtpu: 0.0.40
codegen_flags: <defaults>
</compile_context>

<pallas_src>
import functools

import jax
import jax.numpy as jnp
from jax.experimental import pallas as pl
from jax.experimental.pallas import tpu as pltpu


def conv_multiscale_kernel(x_ref, wb_ref, o_ref, *, kmax, out_h):
    # x_ref : (1, Hp, Dp)         lane-packed padded input row-slab, Dp = pad128(Wp*Cin + 1)
    #                             (lane Wp*Cin is the constant-1 bias column)
    # wb_ref: (kmax, Dp, W*Cout)  banded block weights (kw, cin and bias folded into rows)
    # o_ref : (1, H, W*Cout)      lane-dense output slab
    x = x_ref[0]                                                   # (Hp, Dp)
    # kh = 0 initialises the accumulator (includes the bias row of WB[0]).
    acc = jnp.dot(x[0:out_h, :], wb_ref[0], preferred_element_type=jnp.float32)
    for kh in range(1, kmax):
        # Row shift only (lanes stay tile-aligned); kw & cin live in the contraction.
        # TODO(synk): cast lhs/wb to bf16 here for peak MXU throughput on v5e/v6e
        # when bf16 activations are acceptable.
        acc = acc + jnp.dot(x[kh:kh + out_h, :], wb_ref[kh],
                            preferred_element_type=jnp.float32)
    o_ref[0] = jnp.where(acc > 0, acc, 0.1 * acc)                  # LeakyReLU(0.1)


def conv_multiscale(x_nchw, weights, biases, kernel_sizes):
    """x_nchw: (N, Cin, H, W).  weights[i]: (k_i, k_i, Cin, Cout_i) HWIO.  biases[i]: (Cout_i,)."""
    assert all(k % 2 == 1 for k in kernel_sizes), "odd kernel sizes assumed"
    N, Cin, H, W = x_nchw.shape
    kmax = max(kernel_sizes)
    pad = (kmax - 1) // 2
    Hp, Wp = H + 2 * pad, W + 2 * pad

    # --- merge all branches into one Kmax x Kmax conv (zero-embed smaller kernels) ---
    merged = []
    for k, wk in zip(kernel_sizes, weights):
        off = (kmax - k) // 2
        wk_full = jnp.zeros((kmax, kmax, Cin, wk.shape[-1]), jnp.float32)
        wk_full = wk_full.at[off:off + k, off:off + k].set(wk.astype(jnp.float32))
        merged.append(wk_full)
    wm = jnp.concatenate(merged, axis=-1)                      # (kmax, kmax, Cin, Cout)
    b_cat = jnp.concatenate([b.astype(jnp.float32).reshape(-1) for b in biases])
    Cout = wm.shape[-1]

    # --- banded block weights: WB[kh, (w+kw)*Cin + ci, w*Cout + co] = wm[kh, kw, ci, co] ---
    shift = jnp.stack([jnp.eye(Wp, W, k=-kw, dtype=jnp.float32) for kw in range(kmax)])
    wb = jnp.einsum("kpw,hkio->hpiwo", shift, wm).reshape(kmax, Wp * Cin, W * Cout)
    dp = Wp * Cin
    dp_pad = ((dp + 1 + 127) // 128) * 128      # +1 reserves a lane for the bias column
    wb = jnp.pad(wb, ((0, 0), (0, dp_pad - dp), (0, 0)))
    # bias folded into the kh=0 band on the reserved row (lane dp of the input is 1.0)
    wb = wb.at[0, dp, :].set(jnp.tile(b_cat, W))

    # --- lane-packed, spatially padded input: (N, Hp, Wp*Cin [+ ones lane]) padded to Dp ---
    # TODO(synk): for large inputs, fuse this transpose/pad/pack into the producer or
    # handle the 1-pixel halo in-kernel and add a spatial grid axis (v7x's 64 MiB VMEM).
    x_nhwc = jnp.transpose(x_nchw, (0, 2, 3, 1)).astype(jnp.float32)
    x_p = jnp.pad(x_nhwc, ((0, 0), (pad, pad), (pad, pad), (0, 0)))
    x_pack = x_p.reshape(N, Hp, dp)
    x_pack = jnp.pad(x_pack, ((0, 0), (0, 0), (0, dp_pad - dp)))
    x_pack = x_pack.at[:, :, dp].set(1.0)       # constant-1 column -> bias via the MXU

    # actual MXU work + bytes moved (advisory to XLA's scheduler)
    flops = 2 * N * kmax * H * dp_pad * W * Cout
    bytes_accessed = 4 * (x_pack.size + wb.size + N * H * W * Cout)

    kernel = functools.partial(conv_multiscale_kernel, kmax=kmax, out_h=H)

    out_lane = pl.pallas_call(
        kernel,
        out_shape=jax.ShapeDtypeStruct((N, H, W * Cout), jnp.float32),
        grid_spec=pltpu.PrefetchScalarGridSpec(
            num_scalar_prefetch=0,
            grid=(N,),
            in_specs=[
                pl.BlockSpec((1, Hp, dp_pad), lambda n: (n, 0, 0)),
                pl.BlockSpec((kmax, dp_pad, W * Cout), lambda n: (0, 0, 0)),
            ],
            out_specs=pl.BlockSpec((1, H, W * Cout), lambda n: (n, 0, 0)),
        ),
        compiler_params=pltpu.CompilerParams(
            dimension_semantics=("parallel",),
            vmem_limit_bytes=32 * 1024 * 1024,
        ),
        cost_estimate=pl.CostEstimate(
            flops=flops, transcendentals=0, bytes_accessed=bytes_accessed),
    )(x_pack, wb)

    # (N, H, W*Cout) -> (N, H, W, Cout) -> NCHW (PyTorch convention)
    out_nhwc = out_lane.reshape(N, H, W, Cout)
    return jnp.transpose(out_nhwc, (0, 3, 1, 2))


def conv_multiscale_ref(x_nchw, weights, biases, kernel_sizes):
    """Pure-JAX reference (NCHW in/out) matching the PyTorch module."""
    outs = []
    for k, wk, bk in zip(kernel_sizes, weights, biases):
        dn = jax.lax.conv_dimension_numbers(x_nchw.shape, wk.shape,
                                            ("NCHW", "HWIO", "NCHW"))
        y = jax.lax.conv_general_dilated(x_nchw, wk, (1, 1), "SAME",
                                         dimension_numbers=dn)
        y = y + bk.reshape(1, -1, 1, 1)
        outs.append(jnp.where(y > 0, y, 0.1 * y))
    return jnp.concatenate(outs, axis=1)


if __name__ == "__main__":
    # ConvMultiscale(in_ch=4, out_ch=8, kernel_size=[3, 5]) on a 2x4x16x16 input.
    N, Cin, out_ch, H, W = 2, 4, 8, 16, 16
    kernel_sizes = (3, 5)

    # per-branch output channels exactly as the PyTorch module computes them
    n_per = out_ch // len(kernel_sizes)
    out_chs = []
    for i, k in enumerate(kernel_sizes):
        if i + 1 == len(kernel_sizes):
            out_chs.append(out_ch - n_per * i)
        else:
            out_chs.append(n_per)

    key = jax.random.PRNGKey(0)
    keys = jax.random.split(key, 1 + 2 * len(kernel_sizes))
    x = jax.random.normal(keys[0], (N, Cin, H, W), jnp.float32)

    weights, biases = [], []
    for i, (k, oc) in enumerate(zip(kernel_sizes, out_chs)):
        weights.append(jax.random.normal(keys[1 + 2 * i], (k, k, Cin, oc), jnp.float32) * 0.1)
        biases.append(jax.random.normal(keys[2 + 2 * i], (oc,), jnp.float32) * 0.1)

    fwd = jax.jit(functools.partial(conv_multiscale, kernel_sizes=kernel_sizes))
    out = jax.block_until_ready(fwd(x, weights, biases))
    ref = jax.block_until_ready(conv_multiscale_ref(x, weights, biases, kernel_sizes))

    assert out.shape == (N, out_ch, H, W), out.shape
    max_err = float(jnp.max(jnp.abs(out - ref)))
    assert jnp.allclose(out, ref, atol=5e-4, rtol=5e-4), max_err
    print("KERNEL_OK")
</pallas_src>

<mosaic_0001>
module attributes {stable_mosaic.version = 11 : i64} {
  func.func @conv_multiscale_kernel(%arg0: i32, %arg1: memref<1x20x128xf32, #tpu.memory_space<vmem>>, %arg2: memref<5x128x128xf32, #tpu.memory_space<vmem>>, %arg3: memref<1x16x128xf32, #tpu.memory_space<vmem>>) attributes {dimension_semantics = [#tpu.dimension_semantics<parallel>], iteration_bounds = array<i64: 2>, scalar_prefetch = 0 : i64, scratch_operands = 0 : i64, tpu.core_type = #tpu.core_type<tc>, window_params = [{transform_indices = @transform_0, window_bounds = array<i64: 1, 20, 128>}, {pipeline_mode = #tpu.pipeline_mode<synchronous>, transform_indices = @transform_1, window_bounds = array<i64: 5, 128, 128>}, {transform_indices = @transform_2, window_bounds = array<i64: 1, 16, 128>}]} {
    %c0 = arith.constant 0 : index
    %c0_0 = arith.constant 0 : index
    %c0_1 = arith.constant 0 : index
    %0 = vector.load %arg1[%c0, %c0_0, %c0_1] : memref<1x20x128xf32, #tpu.memory_space<vmem>>, vector<1x20x128xf32>
    %1 = vector.shape_cast %0 : vector<1x20x128xf32> to vector<20x128xf32>
    %2 = vector.extract_strided_slice %1 {offsets = [0, 0], sizes = [16, 128], strides = [1, 1]} : vector<20x128xf32> to vector<16x128xf32>
    %c0_2 = arith.constant 0 : index
    %c0_3 = arith.constant 0 : index
    %c0_4 = arith.constant 0 : index
    %3 = vector.load %arg2[%c0_2, %c0_3, %c0_4] : memref<5x128x128xf32, #tpu.memory_space<vmem>>, vector<1x128x128xf32>
    %4 = vector.shape_cast %3 : vector<1x128x128xf32> to vector<128x128xf32>
    %cst = arith.constant dense<0.000000e+00> : vector<16x128xf32>
    %5 = tpu.matmul %2, %4, %cst {dimension_numbers = #tpu.dot_dimension_numbers<[1], [0], [0], [1], [0, 0, 1, 1], [], []>} : vector<16x128xf32>, vector<128x128xf32>, vector<16x128xf32> -> vector<16x128xf32>
    %6 = vector.extract_strided_slice %1 {offsets = [1, 0], sizes = [16, 128], strides = [1, 1]} : vector<20x128xf32> to vector<16x128xf32>
    %c1 = arith.constant 1 : index
    %c0_5 = arith.constant 0 : index
    %c0_6 = arith.constant 0 : index
    %7 = vector.load %arg2[%c1, %c0_5, %c0_6] : memref<5x128x128xf32, #tpu.memory_space<vmem>>, vector<1x128x128xf32>
    %8 = vector.shape_cast %7 : vector<1x128x128xf32> to vector<128x128xf32>
    %cst_7 = arith.constant dense<0.000000e+00> : vector<16x128xf32>
    %9 = tpu.matmul %6, %8, %cst_7 {dimension_numbers = #tpu.dot_dimension_numbers<[1], [0], [0], [1], [0, 0, 1, 1], [], []>} : vector<16x128xf32>, vector<128x128xf32>, vector<16x128xf32> -> vector<16x128xf32>
    %10 = arith.addf %5, %9 : vector<16x128xf32>
    %11 = vector.extract_strided_slice %1 {offsets = [2, 0], sizes = [16, 128], strides = [1, 1]} : vector<20x128xf32> to vector<16x128xf32>
    %c2 = arith.constant 2 : index
    %c0_8 = arith.constant 0 : index
    %c0_9 = arith.constant 0 : index
    %12 = vector.load %arg2[%c2, %c0_8, %c0_9] : memref<5x128x128xf32, #tpu.memory_space<vmem>>, vector<1x128x128xf32>
    %13 = vector.shape_cast %12 : vector<1x128x128xf32> to vector<128x128xf32>
    %cst_10 = arith.constant dense<0.000000e+00> : vector<16x128xf32>
    %14 = tpu.matmul %11, %13, %cst_10 {dimension_numbers = #tpu.dot_dimension_numbers<[1], [0], [0], [1], [0, 0, 1, 1], [], []>} : vector<16x128xf32>, vector<128x128xf32>, vector<16x128xf32> -> vector<16x128xf32>
    %15 = arith.addf %10, %14 : vector<16x128xf32>
    %16 = vector.extract_strided_slice %1 {offsets = [3, 0], sizes = [16, 128], strides = [1, 1]} : vector<20x128xf32> to vector<16x128xf32>
    %c3 = arith.constant 3 : index
    %c0_11 = arith.constant 0 : index
    %c0_12 = arith.constant 0 : index
    %17 = vector.load %arg2[%c3, %c0_11, %c0_12] : memref<5x128x128xf32, #tpu.memory_space<vmem>>, vector<1x128x128xf32>
    %18 = vector.shape_cast %17 : vector<1x128x128xf32> to vector<128x128xf32>
    %cst_13 = arith.constant dense<0.000000e+00> : vector<16x128xf32>
    %19 = tpu.matmul %16, %18, %cst_13 {dimension_numbers = #tpu.dot_dimension_numbers<[1], [0], [0], [1], [0, 0, 1, 1], [], []>} : vector<16x128xf32>, vector<128x128xf32>, vector<16x128xf32> -> vector<16x128xf32>
    %20 = arith.addf %15, %19 : vector<16x128xf32>
    %21 = vector.extract_strided_slice %1 {offsets = [4, 0], sizes = [16, 128], strides = [1, 1]} : vector<20x128xf32> to vector<16x128xf32>
    %c4 = arith.constant 4 : index
    %c0_14 = arith.constant 0 : index
    %c0_15 = arith.constant 0 : index
    %22 = vector.load %arg2[%c4, %c0_14, %c0_15] : memref<5x128x128xf32, #tpu.memory_space<vmem>>, vector<1x128x128xf32>
    %23 = vector.shape_cast %22 : vector<1x128x128xf32> to vector<128x128xf32>
    %cst_16 = arith.constant dense<0.000000e+00> : vector<16x128xf32>
    %24 = tpu.matmul %21, %23, %cst_16 {dimension_numbers = #tpu.dot_dimension_numbers<[1], [0], [0], [1], [0, 0, 1, 1], [], []>} : vector<16x128xf32>, vector<128x128xf32>, vector<16x128xf32> -> vector<16x128xf32>
    %25 = arith.addf %20, %24 : vector<16x128xf32>
    %cst_17 = arith.constant 0.000000e+00 : f32
    %26 = vector.broadcast %cst_17 : f32 to vector<16x128xf32>
    %27 = arith.cmpf ogt, %25, %26 : vector<16x128xf32>
    %cst_18 = arith.constant 1.000000e-01 : f32
    %28 = vector.broadcast %cst_18 : f32 to vector<16x128xf32>
    %29 = arith.mulf %28, %25 : vector<16x128xf32>
    %30 = arith.select %27, %25, %29 : vector<16x128xi1>, vector<16x128xf32>
    %c0_19 = arith.constant 0 : index
    %c0_20 = arith.constant 0 : index
    %c0_21 = arith.constant 0 : index
    %31 = vector.load %arg3[%c0_19, %c0_20, %c0_21] : memref<1x16x128xf32, #tpu.memory_space<vmem>>, vector<1x16x128xf32>
    %32 = vector.shape_cast %31 : vector<1x16x128xf32> to vector<16x128xf32>
    %33 = vector.shape_cast %30 : vector<16x128xf32> to vector<1x16x128xf32>
    tpu.vector_store %arg3[%c0_19, %c0_20, %c0_21], %33 {strides = array<i32>} : memref<1x16x128xf32, #tpu.memory_space<vmem>>, vector<1x16x128xf32>,
    return
  }
  func.func @transform_0(%arg0: i32) -> (i32, i32, i32) {
    %c0_i32 = arith.constant 0 : i32
    %c0_i32_0 = arith.constant 0 : i32
    %c0_i32_1 = arith.constant 0 : i32
    return %arg0, %c0_i32, %c0_i32_0 : i32, i32, i32
  }
  func.func @transform_1(%arg0: i32) -> (i32, i32, i32) {
    %c0_i32 = arith.constant 0 : i32
    %c0_i32_0 = arith.constant 0 : i32
    %c0_i32_1 = arith.constant 0 : i32
    %c0_i32_2 = arith.constant 0 : i32
    return %c0_i32, %c0_i32_0, %c0_i32_1 : i32, i32, i32
  }
  func.func @transform_2(%arg0: i32) -> (i32, i32, i32) {
    %c0_i32 = arith.constant 0 : i32
    %c0_i32_0 = arith.constant 0 : i32
    %c0_i32_1 = arith.constant 0 : i32
    return %arg0, %c0_i32, %c0_i32_0 : i32, i32, i32
  }
}

</mosaic_0001>

<llo_original>
// kernel: tile.8
$region0: #{tile.8}
  #allocation0 [shape = 's32[1]{0}', space=sflag, size = 0x4, scoped, tag = 'scoped memory for tile.8']
  %s0 = inlined_call_operand.vmem [shape: f32[8], index: 0, kind: input, shape index: {}]
  %s1 = inlined_call_operand.vmem [shape: f32[16,8], index: 1, kind: output, shape index: {}]
  // Predicated region
  $region2: #{tile.8} parent=0 // pred_check
    _
  $region3: #{tile.8} parent=0 // pred_check_branch
    %3 = sbr.rel (0) target = $region5
  $region4: #{tile.8} parent=0 // pred_region
    _
  $region5: #{tile.8} parent=0 // pred_fallthru
    _
  %v4 = vld [vmem:[%s0] ss:$0 sm:$0xff]
  %5 = vst [vmem:[%s1] sm:$0xff] %v4
  %s6 = scalar_lea.vmem %s1, 8
  %7 = vst [vmem:[%s6] sm:$0xff] %v4

// kernel: conv_multiscale.1
$region0: #{conv_multiscale.1}
  #allocation0 [shape = 'u32[]', space=smem, size = 0x4, offset = 0x4, fixed_abs, tag = 'smem constant byte address 0x4 - core index']
  #allocation1 [shape = 'u32[72,128]{1,0:T(1,128)}', space=vmem, size = 0x9000, scoped, tag = 'internal scratch']
  %s0 = inlined_call_operand.vmem [shape: f32[2,20,128], index: 0, kind: input, shape index: {}]
  %s1 = inlined_call_operand.vmem [shape: f32[5,128,128], index: 1, kind: input, shape index: {}]
  %s2 = inlined_call_operand.vmem [shape: f32[2,16,128], index: 2, kind: output, shape index: {}]
  %s3 = sld [smem:[#allocation0]]
  $region41: #{conv_multiscale.1} parent=0
    _
  %s5 = ssub.s32 1, %s3
  %s6 = scalar_select 0, %s5, %s3
  loop: start=0, step=1, limit=4
  $region2: #{conv_multiscale.1} parent=0 // loop_pre_header
    _
  $region3: #{conv_multiscale.1} parent=0 // loop_header
    %s8 = sphi 0, %s12
    %p9 = scmp.ge.s32.totalorder %s8, 4
    %s18 = sphi 0, %s20
    %s21 = sphi 0, %s18
    %s22 = sphi 0, %s21
    %s38 = sphi 0, %s22
    %s42 = sphi 0, %s42
    %s44 = sphi 0, %s42
    %s45 = sphi 0, %s44
    %s59 = sphi 0, %s45
    %s65 = sphi 0, %s67
    %s68 = sphi 0, %s65
    %s69 = sphi 0, %s68
    %s85 = sphi 0, %s69
  $region4: #{conv_multiscale.1} parent=0 // loop_header_branch
    %11 = sbr.rel (%p9) target = $region8
  $region5: #{conv_multiscale.1} parent=0 // loop_body
    %s13 = ssub.s32 %s8, 1
    %s14 = ssub.s32 %s8, 2
    %s15 = sadd.s32 %s8, 1
    %s16 = ssub.s32 %s8, %s15
    %p17 = scmp.eq.s32.totalorder %s16, 0
    %s19 = sadd.s32 %s18, 1
    %s20 = scalar_select %p17, %s18, %s19
    %p23 = pneg %p17
    %p24 = scmp.eq.s32.totalorder %s8, 1
    %p25 = por %p23, %p24
    %p26 = scmp.ne.s32.totalorder %s18, %s21
    %p27 = scmp.eq.s32.totalorder %s8, 0
    %p28 = por %p26, %p27
    %p29 = scmp.ne.s32.totalorder %s18, %s21
    %p30 = scmp.eq.s32.totalorder %s13, 1
    %p31 = por %p29, %p30
    %p32 = scmp.ne.s32.totalorder %s21, %s22
    %p33 = scmp.eq.s32.totalorder %s13, 0
    %p34 = por %p32, %p33
    %p35 = scmp.ne.s32.totalorder %s21, %s22
    %p36 = scmp.eq.s32.totalorder %s14, 1
    %p37 = por %p35, %p36
    %p39 = scmp.ne.s32.totalorder %s22, %s38
    %p40 = scmp.eq.s32.totalorder %s14, 0
    %p41 = por %p39, %p40
    %s43 = sadd.s32 %s42, 1
    %p46 = scmp.eq.s32.totalorder %s8, 1
    %p47 = scmp.ne.s32.totalorder %s42, %s44
    %p48 = scmp.eq.s32.totalorder %s8, 0
    %p49 = por %p47, %p48
    %p50 = scmp.ne.s32.totalorder %s42, %s44
    %p51 = scmp.eq.s32.totalorder %s13, 1
    %p52 = por %p50, %p51
    %p53 = scmp.ne.s32.totalorder %s44, %s45
    %p54 = scmp.eq.s32.totalorder %s13, 0
    %p55 = por %p53, %p54
    %p56 = scmp.ne.s32.totalorder %s44, %s45
    %p57 = scmp.eq.s32.totalorder %s14, 1
    %p58 = por %p56, %p57
    %p60 = scmp.ne.s32.totalorder %s45, %s59
    %p61 = scmp.eq.s32.totalorder %s14, 0
    %p62 = por %p60, %p61
    %s63 = ssub.s32 %s8, %s15
    %p64 = scmp.eq.s32.totalorder %s63, 0
    %s66 = sadd.s32 %s65, 1
    %s67 = scalar_select %p64, %s65, %s66
    %p70 = pneg %p64
    %p71 = scmp.eq.s32.totalorder %s8, 1
    %p72 = por %p70, %p71
    %p73 = scmp.ne.s32.totalorder %s65, %s68
    %p74 = scmp.eq.s32.totalorder %s8, 0
    %p75 = por %p73, %p74
    %p76 = scmp.ne.s32.totalorder %s65, %s68
    %p77 = scmp.eq.s32.totalorder %s13, 1
    %p78 = por %p76, %p77
    %p79 = scmp.ne.s32.totalorder %s68, %s69
    %p80 = scmp.eq.s32.totalorder %s13, 0
    %p81 = por %p79, %p80
    %p82 = scmp.ne.s32.totalorder %s68, %s69
    %p83 = scmp.eq.s32.totalorder %s14, 1
    %p84 = por %p82, %p83
    %p86 = scmp.ne.s32.totalorder %s69, %s85
    %p87 = scmp.eq.s32.totalorder %s14, 0
    %p88 = por %p86, %p87
    %p89 = scmp.le.s32.totalorder 1, %s8
    %p90 = scmp.lt.s32.totalorder %s8, 3
    %p91 = pnand %p89, %p90
    %p92 = pneg %p91
    // Predicated region
    $region9: #{conv_multiscale.1} parent=5 // pred_check
      _
    $region10: #{conv_multiscale.1} parent=5 // pred_check_branch
      %94 = sbr.rel (%p91) target = $region12
    $region11: #{conv_multiscale.1} parent=5 // pred_region
      %s95 = ssub.s32 %s8, 1
      // Predicated region
      $region13: #{conv_multiscale.1} parent=11 // pred_check
        %p96 = pneg %p55
      $region14: #{conv_multiscale.1} parent=11 // pred_check_branch
        %98 = sbr.rel (%p96) target = $region16
      $region15: #{conv_multiscale.1} parent=11 // pred_region
        _
      $region16: #{conv_multiscale.1} parent=11 // pred_fallthru
        _
    $region12: #{conv_multiscale.1} parent=5 // pred_fallthru
      _
    %p99 = scmp.lt.s32.totalorder %s8, 2
    // Predicated region
    $region17: #{conv_multiscale.1} parent=5 // pred_check
      %p100 = pneg %p99
    $region18: #{conv_multiscale.1} parent=5 // pred_check_branch
      %102 = sbr.rel (%p100) target = $region20
    $region19: #{conv_multiscale.1} parent=5 // pred_region
      // Predicated region
      $region21: #{conv_multiscale.1} parent=19 // pred_check
        %p103 = pneg %p28
      $region22: #{conv_multiscale.1} parent=19 // pred_check_branch
        %105 = sbr.rel (%p103) target = $region24
      $region23: #{conv_multiscale.1} parent=19 // pred_region
        %p106 = scmp.lt.s32.totalorder %s8, 1
        %s107 = scalar_select %p106, %s8, 1
        %s108 = smul.addr %s107, 3
        %s109 = smul.addr %s108, 8
        %s110 = scalar_lea.vmem %s0, %s109
      $region24: #{conv_multiscale.1} parent=19 // pred_fallthru
        _
    $region20: #{conv_multiscale.1} parent=5 // pred_fallthru
      _
    %p111 = scmp.le.s32.totalorder 1, %s8
    %p112 = scmp.lt.s32.totalorder %s8, 3
    %p113 = pnand %p111, %p112
    %p114 = pneg %p113
    // Predicated region
    $region25: #{conv_multiscale.1} parent=5 // pred_check
      _
    $region26: #{conv_multiscale.1} parent=5 // pred_check_branch
      %116 = sbr.rel (%p113) target = $region28
    $region27: #{conv_multiscale.1} parent=5 // pred_region
      %s117 = ssub.s32 %s8, 1
      %p118 = scmp.lt.s32.totalorder %s13, 1
      %s119 = scalar_select %p118, %s13, 1
      %s120 = smul.addr %s119, 3
      %s121 = smul.addr %s120, 8
      %s122 = scalar_lea.vmem %s0, %s121
      %p123 = pneg %p34
      %p124 = pneg %p31
      %p125 = pneg %p55
      %p126 = pneg %p52
      %p127 = pneg %p81
      %p128 = pneg %p78
      %p129 = scmp.lt.s32.totalorder %s13, 1
      %s130 = scalar_select %p129, %s13, 1
      %s131 = smul.addr %s130, 2
      %s132 = smul.addr %s131, 8
      %s133 = scalar_lea.vmem %s2, %s132
      %p134 = scmp.lt.s32.totalorder %s13, 1
      %s135 = scalar_select %p134, %s13, 1
      %s136 = smul.addr %s135, 3
      %s137 = smul.addr %s136, 8
      %s138 = scalar_lea.vmem %s0, %s137
      %p139 = scmp.lt.s32.totalorder %s13, 1
      %s140 = scalar_select %p139, %s13, 1
      %s141 = smul.addr %s140, 2
      %s142 = smul.addr %s141, 8
      %s143 = scalar_lea.vmem %s2, %s142
      %v144 = vld [vmem:[%s138] sm:$0xff]
      %v145 = vld [vmem:[%s138 + $0x8] sm:$0xff]
      %v146 = vld [vmem:[%s138 + $0x10] sm:$0xf]
      %v147 = vld [vmem:[%s1] sm:$0xff]
      %v148 = vld [vmem:[%s1 + $0x8] sm:$0xff]
      %v149 = vld [vmem:[%s1 + $0x10] sm:$0xff]
      %v150 = vld [vmem:[%s1 + $0x18] sm:$0xff]
      %v151 = vld [vmem:[%s1 + $0x20] sm:$0xff]
      %v152 = vld [vmem:[%s1 + $0x28] sm:$0xff]
      %v153 = vld [vmem:[%s1 + $0x30] sm:$0xff]
      %v154 = vld [vmem:[%s1 + $0x38] sm:$0xff]
      %v155 = vld [vmem:[%s1 + $0x40] sm:$0xff]
      %v156 = vld [vmem:[%s1 + $0x48] sm:$0xff]
      %v157 = vld [vmem:[%s1 + $0x50] sm:$0xff]
      %v158 = vld [vmem:[%s1 + $0x58] sm:$0xff]
      %v159 = vld [vmem:[%s1 + $0x60] sm:$0xff]
      %v160 = vld [vmem:[%s1 + $0x68] sm:$0xff]
      %v161 = vld [vmem:[%s1 + $0x70] sm:$0xff]
      %v162 = vld [vmem:[%s1 + $0x78] sm:$0xff]
      %s163 = scalar_lea.vmem %s1, 128
      %v164 = vld [vmem:[%s163] sm:$0xff]
      %v165 = vld [vmem:[%s163 + $0x8] sm:$0xff]
      %v166 = vld [vmem:[%s163 + $0x10] sm:$0xff]
      %v167 = vld [vmem:[%s163 + $0x18] sm:$0xff]
      %v168 = vld [vmem:[%s163 + $0x20] sm:$0xff]
      %v169 = vld [vmem:[%s163 + $0x28] sm:$0xff]
      %v170 = vld [vmem:[%s163 + $0x30] sm:$0xff]
      %v171 = vld [vmem:[%s163 + $0x38] sm:$0xff]
      %v172 = vld [vmem:[%s163 + $0x40] sm:$0xff]
      %v173 = vld [vmem:[%s163 + $0x48] sm:$0xff]
      %v174 = vld [vmem:[%s163 + $0x50] sm:$0xff]
      %v175 = vld [vmem:[%s163 + $0x58] sm:$0xff]
      %v176 = vld [vmem:[%s163 + $0x60] sm:$0xff]
      %v177 = vld [vmem:[%s163 + $0x68] sm:$0xff]
      %v178 = vld [vmem:[%s163 + $0x70] sm:$0xff]
      %v179 = vld [vmem:[%s163 + $0x78] sm:$0xff]
      %vm183 = vcmask 1046528
      %v184 = vrot.slane %v144, 1
      %v185 = vrot.slane %v145, 1
      %v186 = vsel %vm183, %v184, %v185
      %v187 = vrot.slane %v146, 1
      %v188 = vsel %vm183, %v185, %v187
      %191 = vmatpush.msra.mxu0 %v179
      %192 = vmatpush.msra.mxu0 %v178
      %193 = vmatpush.msra.mxu0 %v177
      %194 = vmatpush.msra.mxu0 %v176
      %195 = vmatpush.msra.mxu0 %v175
      %196 = vmatpush.msra.mxu0 %v174
      %197 = vmatpush.msra.mxu0 %v173
      %198 = vmatpush.msra.mxu0 %v172
      %199 = vmatpush.msra.mxu0 %v171
      %200 = vmatpush.msra.mxu0 %v170
      %201 = vmatpush.msra.mxu0 %v169
      %202 = vmatpush.msra.mxu0 %v168
      %203 = vmatpush.msra.mxu0 %v167
      %204 = vmatpush.msra.mxu0 %v166
      %205 = vmatpush.msra.mxu0 %v165
      %206 = vmatpush.msra.mxu0 %v164
      %207 = vmatmul.f32.gmra.mxu0 %v186
      %v208 = vpop.f32.mrf.mxu0
      %v209 = vadd.f32 0.0, %v208
      %210 = vmatmul.f32.gmra.mxu0 %v188
      %v211 = vpop.f32.mrf.mxu0
      %v212 = vadd.f32 0.0, %v211
      %213 = vdwg.mxu0
      %214 = vmatpush.msra.mxu0 %v162
      %215 = vmatpush.msra.mxu0 %v161
      %216 = vmatpush.msra.mxu0 %v160
      %217 = vmatpush.msra.mxu0 %v159
      %218 = vmatpush.msra.mxu0 %v158
      %219 = vmatpush.msra.mxu0 %v157
      %220 = vmatpush.msra.mxu0 %v156
      %221 = vmatpush.msra.mxu0 %v155
      %222 = vmatpush.msra.mxu0 %v154
      %223 = vmatpush.msra.mxu0 %v153
      %224 = vmatpush.msra.mxu0 %v152
      %225 = vmatpush.msra.mxu0 %v151
      %226 = vmatpush.msra.mxu0 %v150
      %227 = vmatpush.msra.mxu0 %v149
      %228 = vmatpush.msra.mxu0 %v148
      %229 = vmatpush.msra.mxu0 %v147
      %230 = vmatmul.f32.gmra.mxu0 %v144
      %v231 = vpop.f32.mrf.mxu0
      %v232 = vadd.f32 %v209, %v231
      %233 = vmatmul.f32.gmra.mxu0 %v145
      %v234 = vpop.f32.mrf.mxu0
      %v235 = vadd.f32 %v212, %v234
      %236 = vdwg.mxu0
      %s237 = scalar_lea.vmem %s1, 256
      %v238 = vld [vmem:[%s237] sm:$0xff]
      %v239 = vld [vmem:[%s237 + $0x8] sm:$0xff]
      %v240 = vld [vmem:[%s237 + $0x10] sm:$0xff]
      %v241 = vld [vmem:[%s237 + $0x18] sm:$0xff]
      %v242 = vld [vmem:[%s237 + $0x20] sm:$0xff]
      %v243 = vld [vmem:[%s237 + $0x28] sm:$0xff]
      %v244 = vld [vmem:[%s237 + $0x30] sm:$0xff]
      %v245 = vld [vmem:[%s237 + $0x38] sm:$0xff]
      %v246 = vld [vmem:[%s237 + $0x40] sm:$0xff]
      %v247 = vld [vmem:[%s237 + $0x48] sm:$0xff]
      %v248 = vld [vmem:[%s237 + $0x50] sm:$0xff]
      %v249 = vld [vmem:[%s237 + $0x58] sm:$0xff]
      %v250 = vld [vmem:[%s237 + $0x60] sm:$0xff]
      %v251 = vld [vmem:[%s237 + $0x68] sm:$0xff]
      %v252 = vld [vmem:[%s237 + $0x70] sm:$0xff]
      %v253 = vld [vmem:[%s237 + $0x78] sm:$0xff]
      %vm254 = vcmask 1045504
      %v255 = vrot.slane %v144, 2
      %v256 = vrot.slane %v145, 2
      %v257 = vsel %vm254, %v255, %v256
      %v258 = vrot.slane %v146, 2
      %v259 = vsel %vm254, %v256, %v258
      %262 = vmatpush.msra.mxu0 %v253
      %263 = vmatpush.msra.mxu0 %v252
      %264 = vmatpush.msra.mxu0 %v251
      %265 = vmatpush.msra.mxu0 %v250
      %266 = vmatpush.msra.mxu0 %v249
      %267 = vmatpush.msra.mxu0 %v248
      %268 = vmatpush.msra.mxu0 %v247
      %269 = vmatpush.msra.mxu0 %v246
      %270 = vmatpush.msra.mxu0 %v245
      %271 = vmatpush.msra.mxu0 %v244
      %272 = vmatpush.msra.mxu0 %v243
      %273 = vmatpush.msra.mxu0 %v242
      %274 = vmatpush.msra.mxu0 %v241
      %275 = vmatpush.msra.mxu0 %v240
      %276 = vmatpush.msra.mxu0 %v239
      %277 = vmatpush.msra.mxu0 %v238
      %278 = vmatmul.f32.gmra.mxu0 %v257
      %v279 = vpop.f32.mrf.mxu0
      %v280 = vadd.f32 0.0, %v279
      %281 = vmatmul.f32.gmra.mxu0 %v259
      %v282 = vpop.f32.mrf.mxu0
      %v283 = vadd.f32 0.0, %v282
      %284 = vdwg.mxu0
      %v285 = vadd.f32 %v232, %v280
      %v286 = vadd.f32 %v235, %v283
      %s287 = scalar_lea.vmem %s1, 384
      %v288 = vld [vmem:[%s287] sm:$0xff]
      %v289 = vld [vmem:[%s287 + $0x8] sm:$0xff]
      %v290 = vld [vmem:[%s287 + $0x10] sm:$0xff]
      %v291 = vld [vmem:[%s287 + $0x18] sm:$0xff]
      %v292 = vld [vmem:[%s287 + $0x20] sm:$0xff]
      %v293 = vld [vmem:[%s287 + $0x28] sm:$0xff]
      %v294 = vld [vmem:[%s287 + $0x30] sm:$0xff]
      %v295 = vld [vmem:[%s287 + $0x38] sm:$0xff]
      %v296 = vld [vmem:[%s287 + $0x40] sm:$0xff]
      %v297 = vld [vmem:[%s287 + $0x48] sm:$0xff]
      %v298 = vld [vmem:[%s287 + $0x50] sm:$0xff]
      %v299 = vld [vmem:[%s287 + $0x58] sm:$0xff]
      %v300 = vld [vmem:[%s287 + $0x60] sm:$0xff]
      %v301 = vld [vmem:[%s287 + $0x68] sm:$0xff]
      %v302 = vld [vmem:[%s287 + $0x70] sm:$0xff]
      %v303 = vld [vmem:[%s287 + $0x78] sm:$0xff]
      %vm304 = vcmask 1044480
      %v305 = vrot.slane %v144, 3
      %v306 = vrot.slane %v145, 3
      %v307 = vsel %vm304, %v305, %v306
      %v308 = vrot.slane %v146, 3
      %v309 = vsel %vm304, %v306, %v308
      %312 = vmatpush.msra.mxu0 %v303
      %313 = vmatpush.msra.mxu0 %v302
      %314 = vmatpush.msra.mxu0 %v301
      %315 = vmatpush.msra.mxu0 %v300
      %316 = vmatpush.msra.mxu0 %v299
      %317 = vmatpush.msra.mxu0 %v298
      %318 = vmatpush.msra.mxu0 %v297
      %319 = vmatpush.msra.mxu0 %v296
      %320 = vmatpush.msra.mxu0 %v295
      %321 = vmatpush.msra.mxu0 %v294
      %322 = vmatpush.msra.mxu0 %v293
      %323 = vmatpush.msra.mxu0 %v292
      %324 = vmatpush.msra.mxu0 %v291
      %325 = vmatpush.msra.mxu0 %v290
      %326 = vmatpush.msra.mxu0 %v289
      %327 = vmatpush.msra.mxu0 %v288
      %328 = vmatmul.f32.gmra.mxu0 %v307
      %v329 = vpop.f32.mrf.mxu0
      %v330 = vadd.f32 0.0, %v329
      %331 = vmatmul.f32.gmra.mxu0 %v309
      %v332 = vpop.f32.mrf.mxu0
      %v333 = vadd.f32 0.0, %v332
      %334 = vdwg.mxu0
      %v335 = vadd.f32 %v285, %v330
      %v336 = vadd.f32 %v286, %v333
      %s337 = scalar_lea.vmem %s1, 512
      %v338 = vld [vmem:[%s337] sm:$0xff]
      %v339 = vld [vmem:[%s337 + $0x8] sm:$0xff]
      %v340 = vld [vmem:[%s337 + $0x10] sm:$0xff]
      %v341 = vld [vmem:[%s337 + $0x18] sm:$0xff]
      %v342 = vld [vmem:[%s337 + $0x20] sm:$0xff]
      %v343 = vld [vmem:[%s337 + $0x28] sm:$0xff]
      %v344 = vld [vmem:[%s337 + $0x30] sm:$0xff]
      %v345 = vld [vmem:[%s337 + $0x38] sm:$0xff]
      %v346 = vld [vmem:[%s337 + $0x40] sm:$0xff]
      %v347 = vld [vmem:[%s337 + $0x48] sm:$0xff]
      %v348 = vld [vmem:[%s337 + $0x50] sm:$0xff]
      %v349 = vld [vmem:[%s337 + $0x58] sm:$0xff]
      %v350 = vld [vmem:[%s337 + $0x60] sm:$0xff]
      %v351 = vld [vmem:[%s337 + $0x68] sm:$0xff]
      %v352 = vld [vmem:[%s337 + $0x70] sm:$0xff]
      %v353 = vld [vmem:[%s337 + $0x78] sm:$0xff]
      %vm354 = vcmask 1043456
      %v355 = vrot.slane %v144, 4
      %v356 = vrot.slane %v145, 4
      %v357 = vsel %vm354, %v355, %v356
      %v358 = vrot.slane %v146, 4
      %v359 = vsel %vm354, %v356, %v358
      %362 = vmatpush.msra.mxu0 %v353
      %363 = vmatpush.msra.mxu0 %v352
      %364 = vmatpush.msra.mxu0 %v351
      %365 = vmatpush.msra.mxu0 %v350
      %366 = vmatpush.msra.mxu0 %v349
      %367 = vmatpush.msra.mxu0 %v348
      %368 = vmatpush.msra.mxu0 %v347
      %369 = vmatpush.msra.mxu0 %v346
      %370 = vmatpush.msra.mxu0 %v345
      %371 = vmatpush.msra.mxu0 %v344
      %372 = vmatpush.msra.mxu0 %v343
      %373 = vmatpush.msra.mxu0 %v342
      %374 = vmatpush.msra.mxu0 %v341
      %375 = vmatpush.msra.mxu0 %v340
      %376 = vmatpush.msra.mxu0 %v339
      %377 = vmatpush.msra.mxu0 %v338
      %378 = vmatmul.f32.gmra.mxu0 %v357
      %v379 = vpop.f32.mrf.mxu0
      %v380 = vadd.f32 0.0, %v379
      %381 = vmatmul.f32.gmra.mxu0 %v359
      %v382 = vpop.f32.mrf.mxu0
      %v383 = vadd.f32 0.0, %v382
      %384 = vdwg.mxu0
      %v385 = vadd.f32 %v335, %v380
      %v386 = vadd.f32 %v336, %v383
      %vm387 = vcmp.gt.f32.partialorder %v385, 0.0
      %vm388 = vcmp.gt.f32.partialorder %v386, 0.0
      %v389 = vmul.f32 %v385, 0.1
      %v390 = vmul.f32 %v386, 0.1
      %v391 = vsel %vm387, %v385, %v389
      %v392 = vsel %vm388, %v386, %v390
      %393 = vst [vmem:[%s143] sm:$0xff] %v391
      %394 = vst [vmem:[%s143 + $0x8] sm:$0xff] %v392
      %p395 = scmp.lt.s32.totalorder %s13, 1
      %s396 = scalar_select %p395, %s13, 1
      %s397 = smul.addr %s396, 2
      %s398 = smul.addr %s397, 8
      %s399 = scalar_lea.vmem %s2, %s398
      // Predicated region
      $region29: #{conv_multiscale.1} parent=27 // pred_check
        %p400 = pneg %p78
      $region30: #{conv_multiscale.1} parent=27 // pred_check_branch
        %402 = sbr.rel (%p400) target = $region32
      $region31: #{conv_multiscale.1} parent=27 // pred_region
        _
      $region32: #{conv_multiscale.1} parent=27 // pred_fallthru
        _
    $region28: #{conv_multiscale.1} parent=5 // pred_fallthru
      _
    %p403 = scmp.le.s32.totalorder 2, %s8
    // Predicated region
    $region33: #{conv_multiscale.1} parent=5 // pred_check
      %p404 = pneg %p403
    $region34: #{conv_multiscale.1} parent=5 // pred_check_branch
      %406 = sbr.rel (%p404) target = $region36
    $region35: #{conv_multiscale.1} parent=5 // pred_region
      %s407 = ssub.s32 %s8, 2
      // Predicated region
      $region37: #{conv_multiscale.1} parent=35 // pred_check
        %p408 = pneg %p84
      $region38: #{conv_multiscale.1} parent=35 // pred_check_branch
        %410 = sbr.rel (%p408) target = $region40
      $region39: #{conv_multiscale.1} parent=35 // pred_region
        %p411 = scmp.lt.s32.totalorder %s14, 1
        %s412 = scalar_select %p411, %s14, 1
        %s413 = smul.addr %s412, 2
        %s414 = smul.addr %s413, 8
        %s415 = scalar_lea.vmem %s2, %s414
      $region40: #{conv_multiscale.1} parent=35 // pred_fallthru
        _
    $region36: #{conv_multiscale.1} parent=5 // pred_fallthru
      _
  $region6: #{conv_multiscale.1} parent=0 // loop_footer
    %s12 = sadd.s32 1, %s8
  $region7: #{conv_multiscale.1} parent=0 // loop_footer_branch
    %7 = sbr.rel target = $region3
  $region8: #{conv_multiscale.1} parent=0 // loop_exit
    _

</llo_original>
